<compile_context>
chip_gen: v5e
topology: v5e:2x2
jax: 0.10.0
libtpu: 0.0.40
codegen_flags: <defaults>
</compile_context>

<pallas_src>
import math

import jax
import jax.numpy as jnp
from jax.experimental import pallas as pl
from jax.experimental.pallas import tpu as pltpu

_LANE = 128               # lane width of a vreg
_TILE_BYTES = 2 << 20     # ~2 MiB per tile (1024x512 f32 equivalent)
_VMEM_LIMIT = 24 << 20    # 2 in + 2 out buffers (8 MiB) + generous headroom


def _transpose_kernel(x_ref, o_ref):
    # x_ref view: (tD1, tD2); o_ref view: (tD2, tD1). Single in-tile XLU
    # transpose. '.T' is safe only because pl.Squeezed() keeps the refs 2-D
    # (on a 3-D ref '.T' would reverse all axes and silently be wrong).
    o_ref[...] = x_ref[...].T


def _min_lane(itemsize):
    # Keep each DMA row / store at >= 512 B: 128 elems for f32, 256 for bf16,
    # 512 for int8/fp8.
    return max(_LANE, 512 // itemsize)


def _choose_tiles(D1, D2, itemsize):
    """Pick (tD1, tD2): full dims if they fit the byte budget, otherwise
    128-aligned tiles (never below the dtype-aware lane minimum)."""
    budget = max(_TILE_BYTES // itemsize, _LANE * _LANE)
    min_lane = _min_lane(itemsize)
    t1, t2 = D1, D2
    while t1 * t2 > budget:
        if t1 >= t2 and t1 > min_lane:
            t1 = max(min_lane, (t1 // 2) // _LANE * _LANE)
        elif t2 > min_lane:
            t2 = max(min_lane, (t2 // 2) // _LANE * _LANE)
        else:
            break
    return t1, t2


def _pallas_transpose_3d(x):
    """x: (B, D1, D2) -> (B, D2, D1); the (D1, D2) plane transpose runs in-kernel."""
    B, D1, D2 = x.shape
    itemsize = x.dtype.itemsize
    tD1, tD2 = _choose_tiles(D1, D2, itemsize)
    gD1 = pl.cdiv(D1, tD1)
    gD2 = pl.cdiv(D2, tD2)

    # Largest parallel extent first so a 2-TC chip (v7x) shards it across both
    # cores. Any order is correct here: every grid point writes a distinct
    # output block (no revisits, no reduction axis).
    extents = (("b", B), ("i", gD1), ("j", gD2))
    order = tuple(name for name, _ in sorted(extents, key=lambda kv: -kv[1]))
    grid = tuple(dict(extents)[name] for name in order)

    def _index_map(swap_out):
        def index_map(*gs):
            pos = dict(zip(order, gs))
            if swap_out:
                return (pos["b"], pos["j"], pos["i"])
            return (pos["b"], pos["i"], pos["j"])
        return index_map

    bytes_accessed = 2 * B * D1 * D2 * itemsize  # pure bandwidth, zero flops
    return pl.pallas_call(
        _transpose_kernel,
        out_shape=jax.ShapeDtypeStruct((B, D2, D1), x.dtype),
        grid=grid,
        in_specs=[
            pl.BlockSpec((pl.Squeezed(), tD1, tD2), _index_map(False)),
        ],
        out_specs=pl.BlockSpec((pl.Squeezed(), tD2, tD1), _index_map(True)),
        compiler_params=pltpu.CompilerParams(
            dimension_semantics=("parallel", "parallel", "parallel"),
            vmem_limit_bytes=_VMEM_LIMIT,
        ),
        cost_estimate=pl.CostEstimate(
            flops=0, transcendentals=0, bytes_accessed=bytes_accessed),
    )(x)


class Transpose:
    """JAX/Pallas equivalent of the PyTorch Transpose module."""

    def __init__(self, dim_1, dim_2):
        self.dim_1 = dim_1
        self.dim_2 = dim_2

    def __call__(self, x):
        nd = x.ndim
        d1 = self.dim_1 % nd
        d2 = self.dim_2 % nd
        if d1 == d2:
            return x
        lo, hi = (d1, d2) if d1 < d2 else (d2, d1)

        if lo == nd - 2 and hi == nd - 1:
            # Canonical TTS usage: Transpose(-1, -2). The leading axes are
            # contiguous, so fold them into a batch dim with a free reshape
            # (no extra HBM copies) and transpose in-kernel.
            D1, D2 = x.shape[-2], x.shape[-1]
            # Kernel path needs the OUTPUT lane dim (D1) wide enough for dense
            # stores; the input last dim (D2) may be narrow (e.g. 80 mel bins):
            # a full-D2 input tile is still a contiguous HBM read.
            if D1 >= _min_lane(x.dtype.itemsize) and D2 >= 1:
                lead_shape = x.shape[:-2]
                B = int(math.prod(lead_shape)) if lead_shape else 1
                y3 = _pallas_transpose_3d(x.reshape((B, D1, D2)))
                return y3.reshape(lead_shape + (D2, D1))
            # Tiny / lane-sparse output planes: launch + masked stores would
            # dominate; let XLA fuse the layout change into adjacent ops.
            return jnp.swapaxes(x, -1, -2)

        # TODO(synk): non-trailing swaps stay on jnp.swapaxes; only (-1, -2)
        # occurs in the hw_tts predictors.
        return jnp.swapaxes(x, d1, d2)


if __name__ == "__main__":
    key = jax.random.PRNGKey(0)
    k1, k2, k3, k4, k5 = jax.random.split(key, 5)

    # 1) Small example consistent with the module: 4-D tensor, non-trailing
    #    swap with positive dims (fallback path).
    x4 = jax.random.normal(k1, (2, 4, 16, 16), dtype=jnp.float32)
    y4 = jax.block_until_ready(Transpose(1, 3)(x4))
    assert y4.shape == (2, 16, 16, 4), y4.shape
    assert bool(jnp.allclose(y4, jnp.swapaxes(x4, 1, 3)))

    # 2) Small trailing swap (fallback path: output lanes < 128).
    xs = jax.random.normal(k2, (2, 8, 32), jnp.float32)
    ys = jax.block_until_ready(Transpose(-1, -2)(xs))
    assert ys.shape == (2, 32, 8), ys.shape
    assert bool(jnp.allclose(ys, jnp.swapaxes(xs, -1, -2)))

    # 3) Kernel path, f32, full-dim tiles (TTS-like hidden activations).
    xa = jax.random.normal(k3, (2, 256, 384), jnp.float32)
    ya = jax.block_until_ready(Transpose(-1, -2)(xa))
    assert ya.shape == (2, 384, 256), ya.shape
    assert ya.dtype == xa.dtype
    assert bool(jnp.allclose(ya, jnp.swapaxes(xa, -1, -2)))

    # 4) Kernel path, bf16, narrow input last dim (mel-style 80 channels) —
    #    exercises the relaxed D2 guard and dtype-aware lane minimum.
    xb = jax.random.normal(k4, (2, 384, 80), jnp.float32).astype(jnp.bfloat16)
    yb = jax.block_until_ready(Transpose(-1, -2)(xb))
    assert yb.shape == (2, 80, 384), yb.shape
    assert bool(jnp.array_equal(yb, jnp.swapaxes(xb, -1, -2)))

    # 5) Kernel path with real tiling and a ragged edge (1000 = 2*384 + 232):
    #    locks in masked partial-block correctness.
    xr = jax.random.normal(k5, (1, 1000, 640), jnp.float32)
    yr = jax.block_until_ready(Transpose(-2, -1)(xr))
    assert yr.shape == (1, 640, 1000), yr.shape
    assert bool(jnp.allclose(yr, jnp.swapaxes(xr, -2, -1)))

    print("KERNEL_OK")
</pallas_src>

<mosaic_0001>
module attributes {stable_mosaic.version = 11 : i64} {
  func.func @_transpose_kernel(%arg0: i32, %arg1: i32, %arg2: i32, %arg3: memref<1x256x384xf32, #tpu.memory_space<vmem>>, %arg4: memref<1x384x256xf32, #tpu.memory_space<vmem>>) attributes {dimension_semantics = [#tpu.dimension_semantics<parallel>, #tpu.dimension_semantics<parallel>, #tpu.dimension_semantics<parallel>], iteration_bounds = array<i64: 2, 1, 1>, scalar_prefetch = 0 : i64, scratch_operands = 0 : i64, tpu.core_type = #tpu.core_type<tc>, window_params = [{transform_indices = @transform_0, window_bounds = array<i64: 1, 256, 384>}, {transform_indices = @transform_1, window_bounds = array<i64: 1, 384, 256>}]} {
    %c0 = arith.constant 0 : index
    %c0_0 = arith.constant 0 : index
    %c0_1 = arith.constant 0 : index
    %0 = vector.load %arg3[%c0, %c0_0, %c0_1] : memref<1x256x384xf32, #tpu.memory_space<vmem>>, vector<1x256x384xf32>
    %1 = vector.shape_cast %0 : vector<1x256x384xf32> to vector<256x384xf32>
    %2 = tpu.transpose %1, [1, 0] : vector<256x384xf32> -> vector<384x256xf32>
    %c0_2 = arith.constant 0 : index
    %c0_3 = arith.constant 0 : index
    %c0_4 = arith.constant 0 : index
    %3 = vector.load %arg4[%c0_2, %c0_3, %c0_4] : memref<1x384x256xf32, #tpu.memory_space<vmem>>, vector<1x384x256xf32>
    %4 = vector.shape_cast %3 : vector<1x384x256xf32> to vector<384x256xf32>
    %5 = vector.shape_cast %2 : vector<384x256xf32> to vector<1x384x256xf32>
    tpu.vector_store %arg4[%c0_2, %c0_3, %c0_4], %5 {strides = array<i32>} : memref<1x384x256xf32, #tpu.memory_space<vmem>>, vector<1x384x256xf32>,
    return
  }
  func.func @transform_0(%arg0: i32, %arg1: i32, %arg2: i32) -> (i32, i32, i32) {
    %c0_i32 = arith.constant 0 : i32
    return %arg0, %arg1, %arg2 : i32, i32, i32
  }
  func.func @transform_1(%arg0: i32, %arg1: i32, %arg2: i32) -> (i32, i32, i32) {
    %c0_i32 = arith.constant 0 : i32
    return %arg0, %arg2, %arg1 : i32, i32, i32
  }
}

</mosaic_0001>

<llo_original>
// kernel: tpu_custom_call.1
$region0: #{tpu_custom_call.1}
  #allocation0 [shape = 'u32[]', space=smem, size = 0x4, offset = 0x4, fixed_abs, tag = 'smem constant byte address 0x4 - core index']
  #allocation1 [shape = 'u32[72,128]{1,0:T(1,128)}', space=vmem, size = 0x9000, scoped, tag = 'internal scratch']
  %s0 = inlined_call_operand.hbm [shape: f32[2,256,384], index: 0, kind: input, shape index: {}]
  %s1 = inlined_call_operand.hbm [shape: f32[2,384,256], index: 1, kind: output, shape index: {}]
  %s2 = sld [smem:[#allocation0]]
  $region41: #{tpu_custom_call.1} parent=0
    _
  %s4 = ssub.s32 1, %s2
  %s5 = scalar_select 0, %s4, %s2
  $region1: #{tpu_custom_call.1} parent=0
    #allocation2 [shape = 'u8[786432]{0}', space=vmem, size = 0xc0000, scoped, tag = 'input window, operand 0']
    #allocation3 [shape = 's32[2]{0}', space=sflag, size = 0x8, scoped, tag = 'scoped memory for tpu_custom_call.1']
    #allocation4 [shape = 's32[2]{0}', space=sflag, size = 0x8, scoped, tag = 'scoped memory for tpu_custom_call.1']
    #allocation5 [shape = 'u8[786432]{0}', space=vmem, size = 0xc0000, scoped, tag = 'output window, operand 0']
    %6 = vsyncpa [#allocation3], 0
    %s7 = scalar_lea.sflag [#allocation3], 1
    %8 = vsyncpa %s7, 0
    %9 = vsyncpa [#allocation4], 0
    %s10 = scalar_lea.sflag [#allocation4], 1
    %11 = vsyncpa %s10, 0
    loop: start=0, step=1, limit=4
    $region2: #{tpu_custom_call.1} parent=1 // loop_pre_header
      _
    $region3: #{tpu_custom_call.1} parent=1 // loop_header
      %s13 = sphi 0, %s17
      %p14 = scmp.ge.s32.totalorder %s13, 4
      %s20 = sphi 0, %s39
      %s21 = sphi 0, %s35
      %s22 = sphi 0, %s31
      %s23 = sphi 0, %s20
      %s24 = sphi 0, %s21
      %s25 = sphi 0, %s22
      %s26 = sphi 0, %s23
      %s27 = sphi 0, %s24
      %s28 = sphi 0, %s25
      %s46 = sphi 0, %s48
      %s49 = sphi 0, %s46
      %s50 = sphi 0, %s49
      %s66 = sphi 0, %s50
      %s76 = sphi 0, %s78
      %s79 = sphi 0, %s76
      %s80 = sphi 0, %s79
      %s96 = sphi 0, %s80
    $region4: #{tpu_custom_call.1} parent=1 // loop_header_branch
      %16 = sbr.rel (%p14) target = $region8
    $region5: #{tpu_custom_call.1} parent=1 // loop_body
      %s18 = ssub.s32 %s13, 1
      %s19 = ssub.s32 %s13, 2
      %s29 = sadd.s32 1, %s22
      %p30 = scmp.ge.s32.totalorder %s29, 1
      %s31 = scalar_select %p30, 0, %s29
      %s32 = sadd.s32 1, %s21
      %s33 = scalar_select %p30, %s32, %s21
      %p34 = scmp.ge.s32.totalorder %s33, 1
      %s35 = scalar_select %p34, 0, %s33
      %s36 = sadd.s32 1, %s20
      %s37 = scalar_select %p34, %s36, %s20
      %p38 = scmp.ge.s32.totalorder %s37, 2
      %s39 = scalar_select %p38, 0, %s37
      %s40 = ssub.s32 %s20, %s39
      %s41 = ssub.s32 %s21, %s35
      %s42 = sor.u32 %s40, %s41
      %s43 = ssub.s32 %s22, %s31
      %s44 = sor.u32 %s42, %s43
      %p45 = scmp.eq.s32.totalorder %s44, 0
      %s47 = sadd.s32 %s46, 1
      %s48 = scalar_select %p45, %s46, %s47
      %p51 = pneg %p45
      %p52 = scmp.eq.s32.totalorder %s13, 1
      %p53 = por %p51, %p52
      %p54 = scmp.ne.s32.totalorder %s46, %s49
      %p55 = scmp.eq.s32.totalorder %s13, 0
      %p56 = por %p54, %p55
      %p57 = scmp.ne.s32.totalorder %s46, %s49
      %p58 = scmp.eq.s32.totalorder %s18, 1
      %p59 = por %p57, %p58
      %p60 = scmp.ne.s32.totalorder %s49, %s50
      %p61 = scmp.eq.s32.totalorder %s18, 0
      %p62 = por %p60, %p61
      %p63 = scmp.ne.s32.totalorder %s49, %s50
      %p64 = scmp.eq.s32.totalorder %s19, 1
      %p65 = por %p63, %p64
      %p67 = scmp.ne.s32.totalorder %s50, %s66
      %p68 = scmp.eq.s32.totalorder %s19, 0
      %p69 = por %p67, %p68
      %s70 = ssub.s32 %s20, %s39
      %s71 = ssub.s32 %s22, %s31
      %s72 = sor.u32 %s70, %s71
      %s73 = ssub.s32 %s21, %s35
      %s74 = sor.u32 %s72, %s73
      %p75 = scmp.eq.s32.totalorder %s74, 0
      %s77 = sadd.s32 %s76, 1
      %s78 = scalar_select %p75, %s76, %s77
      %p81 = pneg %p75
      %p82 = scmp.eq.s32.totalorder %s13, 1
      %p83 = por %p81, %p82
      %p84 = scmp.ne.s32.totalorder %s76, %s79
      %p85 = scmp.eq.s32.totalorder %s13, 0
      %p86 = por %p84, %p85
      %p87 = scmp.ne.s32.totalorder %s76, %s79
      %p88 = scmp.eq.s32.totalorder %s18, 1
      %p89 = por %p87, %p88
      %p90 = scmp.ne.s32.totalorder %s79, %s80
      %p91 = scmp.eq.s32.totalorder %s18, 0
      %p92 = por %p90, %p91
      %p93 = scmp.ne.s32.totalorder %s79, %s80
      %p94 = scmp.eq.s32.totalorder %s19, 1
      %p95 = por %p93, %p94
      %p97 = scmp.ne.s32.totalorder %s80, %s96
      %p98 = scmp.eq.s32.totalorder %s19, 0
      %p99 = por %p97, %p98
      %p100 = scmp.le.s32.totalorder 1, %s13
      %p101 = scmp.lt.s32.totalorder %s13, 3
      %p102 = pnand %p100, %p101
      %p103 = pneg %p102
      // Predicated region
      $region9: #{tpu_custom_call.1} parent=5 // pred_check
        _
      $region10: #{tpu_custom_call.1} parent=5 // pred_check_branch
        %105 = sbr.rel (%p102) target = $region12
      $region11: #{tpu_custom_call.1} parent=5 // pred_region
        %s106 = ssub.s32 %s13, 1
      $region12: #{tpu_custom_call.1} parent=5 // pred_fallthru
        _
      %p107 = scmp.lt.s32.totalorder %s13, 2
      // Predicated region
      $region13: #{tpu_custom_call.1} parent=5 // pred_check
        %p108 = pneg %p107
      $region14: #{tpu_custom_call.1} parent=5 // pred_check_branch
        %110 = sbr.rel (%p108) target = $region16
      $region15: #{tpu_custom_call.1} parent=5 // pred_region
        // Predicated region
        $region17: #{tpu_custom_call.1} parent=15 // pred_check
          %p111 = pneg %p56
        $region18: #{tpu_custom_call.1} parent=15 // pred_check_branch
          %113 = sbr.rel (%p111) target = $region20
        $region19: #{tpu_custom_call.1} parent=15 // pred_region
          %s114 = sand.u32 %s46, 1
          %s115 = scalar_lea.sflag [#allocation3], %s114
          %s116 = sand.u32 %s46, 1
          %s117 = smul.addr %s116, 768
          %s118 = scalar_lea.vmem [#allocation2], %s117
          %s119 = smul.u32 32, %s21
          %s120 = smul.u32 3, %s22
          %122 = vsyncadd %s115, 0
          %s123 = smul.addr %s119, 3
          %s124 = sadd.s32 %s120, %s123
          %s125 = smul.addr %s20, 96
          %s126 = sadd.s32 %s124, %s125
          %s127 = smul.addr %s126, 8
          %s128 = scalar_lea.hbm %s0, %s127
          %s129 = sshll.u32 %s128, 4
          %s130 = int_to_ptr.hbm [resolvable:$true] %s129
          %s131 = sshll.u32 %s118, 4
          %s132 = int_to_ptr.vmem [resolvable:$true] %s131
          %137 = dma.hbm_to_vmem [thread:$0]  %s130, 12288, %s132, %s115, 384, 384, 24
        $region20: #{tpu_custom_call.1} parent=15 // pred_fallthru
          _
      $region16: #{tpu_custom_call.1} parent=5 // pred_fallthru
        _
      %p138 = scmp.le.s32.totalorder 1, %s13
      %p139 = scmp.lt.s32.totalorder %s13, 3
      %p140 = pnand %p138, %p139
      %p141 = pneg %p140
      // Predicated region
      $region21: #{tpu_custom_call.1} parent=5 // pred_check
        _
      $region22: #{tpu_custom_call.1} parent=5 // pred_check_branch
        %143 = sbr.rel (%p140) target = $region24
      $region23: #{tpu_custom_call.1} parent=5 // pred_region
        %s144 = ssub.s32 %s13, 1
        %s145 = sand.u32 %s49, 1
        %s146 = scalar_lea.sflag [#allocation3], %s145
        %s147 = sand.u32 %s49, 1
        %s148 = smul.addr %s147, 768
        %s149 = scalar_lea.vmem [#allocation2], %s148
        // Predicated region
        $region25: #{tpu_custom_call.1} parent=23 // pred_check
          %p150 = pneg %p62
        $region26: #{tpu_custom_call.1} parent=23 // pred_check_branch
          %152 = sbr.rel (%p150) target = $region28
        $region27: #{tpu_custom_call.1} parent=23 // pred_region
          %154 = dma.done %s146, 12288
        $region28: #{tpu_custom_call.1} parent=23 // pred_fallthru
          _
        %s155 = sand.u32 %s49, 1
        %s156 = scalar_lea.sflag [#allocation3], %s155
        %s157 = sand.u32 %s49, 1
        %s158 = smul.addr %s157, 768
        %s159 = scalar_lea.vmem [#allocation2], %s158
        %p160 = pneg %p62
        %p161 = pneg %p59
        %p162 = pneg %p92
        %p163 = pneg %p89
        %s164 = sand.u32 %s79, 1
        %s165 = scalar_lea.sflag [#allocation4], %s164
        %s166 = sand.u32 %s79, 1
        %s167 = smul.addr %s166, 768
        %s168 = scalar_lea.vmem [#allocation5], %s167
        %s169 = smul.u32 32, %s24
        %s170 = smul.u32 3, %s25
        %s171 = smul.u32 48, %s25
        %s172 = smul.u32 2, %s24
        %v173 = vld [vmem:[%s149] sm:$0xff]
        %v174 = vld [vmem:[%s149 + $0x8] sm:$0xff]
        %v175 = vld [vmem:[%s149 + $0x10] sm:$0xff]
        %v176 = vld [vmem:[%s149 + $0x18] sm:$0xff]
        %v177 = vld [vmem:[%s149 + $0x20] sm:$0xff]
        %v178 = vld [vmem:[%s149 + $0x28] sm:$0xff]
        %v179 = vld [vmem:[%s149 + $0x30] sm:$0xff]
        %v180 = vld [vmem:[%s149 + $0x38] sm:$0xff]
        %v181 = vld [vmem:[%s149 + $0x40] sm:$0xff]
        %v182 = vld [vmem:[%s149 + $0x48] sm:$0xff]
        %v183 = vld [vmem:[%s149 + $0x50] sm:$0xff]
        %v184 = vld [vmem:[%s149 + $0x58] sm:$0xff]
        %v185 = vld [vmem:[%s149 + $0x60] sm:$0xff]
        %v186 = vld [vmem:[%s149 + $0x68] sm:$0xff]
        %v187 = vld [vmem:[%s149 + $0x70] sm:$0xff]
        %v188 = vld [vmem:[%s149 + $0x78] sm:$0xff]
        %v189 = vld [vmem:[%s149 + $0x80] sm:$0xff]
        %v190 = vld [vmem:[%s149 + $0x88] sm:$0xff]
        %v191 = vld [vmem:[%s149 + $0x90] sm:$0xff]
        %v192 = vld [vmem:[%s149 + $0x98] sm:$0xff]
        %v193 = vld [vmem:[%s149 + $0xa0] sm:$0xff]
        %v194 = vld [vmem:[%s149 + $0xa8] sm:$0xff]
        %v195 = vld [vmem:[%s149 + $0xb0] sm:$0xff]
        %v196 = vld [vmem:[%s149 + $0xb8] sm:$0xff]
        %v197 = vld [vmem:[%s149 + $0xc0] sm:$0xff]
        %v198 = vld [vmem:[%s149 + $0xc8] sm:$0xff]
        %v199 = vld [vmem:[%s149 + $0xd0] sm:$0xff]
        %v200 = vld [vmem:[%s149 + $0xd8] sm:$0xff]
        %v201 = vld [vmem:[%s149 + $0xe0] sm:$0xff]
        %v202 = vld [vmem:[%s149 + $0xe8] sm:$0xff]
        %v203 = vld [vmem:[%s149 + $0xf0] sm:$0xff]
        %v204 = vld [vmem:[%s149 + $0xf8] sm:$0xff]
        %v205 = vld [vmem:[%s149 + $0x100] sm:$0xff]
        %v206 = vld [vmem:[%s149 + $0x108] sm:$0xff]
        %v207 = vld [vmem:[%s149 + $0x110] sm:$0xff]
        %v208 = vld [vmem:[%s149 + $0x118] sm:$0xff]
        %v209 = vld [vmem:[%s149 + $0x120] sm:$0xff]
        %v210 = vld [vmem:[%s149 + $0x128] sm:$0xff]
        %v211 = vld [vmem:[%s149 + $0x130] sm:$0xff]
        %v212 = vld [vmem:[%s149 + $0x138] sm:$0xff]
        %v213 = vld [vmem:[%s149 + $0x140] sm:$0xff]
        %v214 = vld [vmem:[%s149 + $0x148] sm:$0xff]
        %v215 = vld [vmem:[%s149 + $0x150] sm:$0xff]
        %v216 = vld [vmem:[%s149 + $0x158] sm:$0xff]
        %v217 = vld [vmem:[%s149 + $0x160] sm:$0xff]
        %v218 = vld [vmem:[%s149 + $0x168] sm:$0xff]
        %v219 = vld [vmem:[%s149 + $0x170] sm:$0xff]
        %v220 = vld [vmem:[%s149 + $0x178] sm:$0xff]
        %v221 = vld [vmem:[%s149 + $0x180] sm:$0xff]
        %v222 = vld [vmem:[%s149 + $0x188] sm:$0xff]
        %v223 = vld [vmem:[%s149 + $0x190] sm:$0xff]
        %v224 = vld [vmem:[%s149 + $0x198] sm:$0xff]
        %v225 = vld [vmem:[%s149 + $0x1a0] sm:$0xff]
        %v226 = vld [vmem:[%s149 + $0x1a8] sm:$0xff]
        %v227 = vld [vmem:[%s149 + $0x1b0] sm:$0xff]
        %v228 = vld [vmem:[%s149 + $0x1b8] sm:$0xff]
        %v229 = vld [vmem:[%s149 + $0x1c0] sm:$0xff]
        %v230 = vld [vmem:[%s149 + $0x1c8] sm:$0xff]
        %v231 = vld [vmem:[%s149 + $0x1d0] sm:$0xff]
        %v232 = vld [vmem:[%s149 + $0x1d8] sm:$0xff]
        %v233 = vld [vmem:[%s149 + $0x1e0] sm:$0xff]
        %v234 = vld [vmem:[%s149 + $0x1e8] sm:$0xff]
        %v235 = vld [vmem:[%s149 + $0x1f0] sm:$0xff]
        %v236 = vld [vmem:[%s149 + $0x1f8] sm:$0xff]
        %v237 = vld [vmem:[%s149 + $0x200] sm:$0xff]
        %v238 = vld [vmem:[%s149 + $0x208] sm:$0xff]
        %v239 = vld [vmem:[%s149 + $0x210] sm:$0xff]
        %v240 = vld [vmem:[%s149 + $0x218] sm:$0xff]
        %v241 = vld [vmem:[%s149 + $0x220] sm:$0xff]
        %v242 = vld [vmem:[%s149 + $0x228] sm:$0xff]
        %v243 = vld [vmem:[%s149 + $0x230] sm:$0xff]
        %v244 = vld [vmem:[%s149 + $0x238] sm:$0xff]
        %v245 = vld [vmem:[%s149 + $0x240] sm:$0xff]
        %v246 = vld [vmem:[%s149 + $0x248] sm:$0xff]
        %v247 = vld [vmem:[%s149 + $0x250] sm:$0xff]
        %v248 = vld [vmem:[%s149 + $0x258] sm:$0xff]
        %v249 = vld [vmem:[%s149 + $0x260] sm:$0xff]
        %v250 = vld [vmem:[%s149 + $0x268] sm:$0xff]
        %v251 = vld [vmem:[%s149 + $0x270] sm:$0xff]
        %v252 = vld [vmem:[%s149 + $0x278] sm:$0xff]
        %v253 = vld [vmem:[%s149 + $0x280] sm:$0xff]
        %v254 = vld [vmem:[%s149 + $0x288] sm:$0xff]
        %v255 = vld [vmem:[%s149 + $0x290] sm:$0xff]
        %v256 = vld [vmem:[%s149 + $0x298] sm:$0xff]
        %v257 = vld [vmem:[%s149 + $0x2a0] sm:$0xff]
        %v258 = vld [vmem:[%s149 + $0x2a8] sm:$0xff]
        %v259 = vld [vmem:[%s149 + $0x2b0] sm:$0xff]
        %v260 = vld [vmem:[%s149 + $0x2b8] sm:$0xff]
        %v261 = vld [vmem:[%s149 + $0x2c0] sm:$0xff]
        %v262 = vld [vmem:[%s149 + $0x2c8] sm:$0xff]
        %v263 = vld [vmem:[%s149 + $0x2d0] sm:$0xff]
        %v264 = vld [vmem:[%s149 + $0x2d8] sm:$0xff]
        %v265 = vld [vmem:[%s149 + $0x2e0] sm:$0xff]
        %v266 = vld [vmem:[%s149 + $0x2e8] sm:$0xff]
        %v267 = vld [vmem:[%s149 + $0x2f0] sm:$0xff]
        %v268 = vld [vmem:[%s149 + $0x2f8] sm:$0xff]
        %269 = vxpose.xlu0.b32.start [1/16] %v173, 128
        %270 = vxpose.xlu0.b32.cont [2/16] %v176, 128
        %271 = vxpose.xlu0.b32.cont [3/16] %v179, 128
        %272 = vxpose.xlu0.b32.cont [4/16] %v182, 128
        %273 = vxpose.xlu0.b32.cont [5/16] %v185, 128
        %274 = vxpose.xlu0.b32.cont [6/16] %v188, 128
        %275 = vxpose.xlu0.b32.cont [7/16] %v191, 128
        %276 = vxpose.xlu0.b32.cont [8/16] %v194, 128
        %277 = vxpose.xlu0.b32.cont [9/16] %v197, 128
        %278 = vxpose.xlu0.b32.cont [10/16] %v200, 128
        %279 = vxpose.xlu0.b32.cont [11/16] %v203, 128
        %280 = vxpose.xlu0.b32.cont [12/16] %v206, 128
        %281 = vxpose.xlu0.b32.cont [13/16] %v209, 128
        %282 = vxpose.xlu0.b32.cont [14/16] %v212, 128
        %283 = vxpose.xlu0.b32.cont [15/16] %v215, 128
        %284 = vxpose.xlu0.b32.end [16/16] %v218, 128
        %v285 = vpop.trf.xlu0
        %v286 = vpop.trf.xlu0
        %v287 = vpop.trf.xlu0
        %v288 = vpop.trf.xlu0
        %v289 = vpop.trf.xlu0
        %v290 = vpop.trf.xlu0
        %v291 = vpop.trf.xlu0
        %v292 = vpop.trf.xlu0
        %v293 = vpop.trf.xlu0
        %v294 = vpop.trf.xlu0
        %v295 = vpop.trf.xlu0
        %v296 = vpop.trf.xlu0
        %v297 = vpop.trf.xlu0
        %v298 = vpop.trf.xlu0
        %v299 = vpop.trf.xlu0
        %v300 = vpop.trf.xlu0
        %301 = vxpose.xlu0.b32.start [1/16] %v174, 128
        %302 = vxpose.xlu0.b32.cont [2/16] %v177, 128
        %303 = vxpose.xlu0.b32.cont [3/16] %v180, 128
        %304 = vxpose.xlu0.b32.cont [4/16] %v183, 128
        %305 = vxpose.xlu0.b32.cont [5/16] %v186, 128
        %306 = vxpose.xlu0.b32.cont [6/16] %v189, 128
        %307 = vxpose.xlu0.b32.cont [7/16] %v192, 128
        %308 = vxpose.xlu0.b32.cont [8/16] %v195, 128
        %309 = vxpose.xlu0.b32.cont [9/16] %v198, 128
        %310 = vxpose.xlu0.b32.cont [10/16] %v201, 128
        %311 = vxpose.xlu0.b32.cont [11/16] %v204, 128
        %312 = vxpose.xlu0.b32.cont [12/16] %v207, 128
        %313 = vxpose.xlu0.b32.cont [13/16] %v210, 128
        %314 = vxpose.xlu0.b32.cont [14/16] %v213, 128
        %315 = vxpose.xlu0.b32.cont [15/16] %v216, 128
        %316 = vxpose.xlu0.b32.end [16/16] %v219, 128
        %v317 = vpop.trf.xlu0
        %v318 = vpop.trf.xlu0
        %v319 = vpop.trf.xlu0
        %v320 = vpop.trf.xlu0
        %v321 = vpop.trf.xlu0
        %v322 = vpop.trf.xlu0
        %v323 = vpop.trf.xlu0
        %v324 = vpop.trf.xlu0
        %v325 = vpop.trf.xlu0
        %v326 = vpop.trf.xlu0
        %v327 = vpop.trf.xlu0
        %v328 = vpop.trf.xlu0
        %v329 = vpop.trf.xlu0
        %v330 = vpop.trf.xlu0
        %v331 = vpop.trf.xlu0
        %v332 = vpop.trf.xlu0
        %333 = vxpose.xlu0.b32.start [1/16] %v175, 128
        %334 = vxpose.xlu0.b32.cont [2/16] %v178, 128
        %335 = vxpose.xlu0.b32.cont [3/16] %v181, 128
        %336 = vxpose.xlu0.b32.cont [4/16] %v184, 128
        %337 = vxpose.xlu0.b32.cont [5/16] %v187, 128
        %338 = vxpose.xlu0.b32.cont [6/16] %v190, 128
        %339 = vxpose.xlu0.b32.cont [7/16] %v193, 128
        %340 = vxpose.xlu0.b32.cont [8/16] %v196, 128
        %341 = vxpose.xlu0.b32.cont [9/16] %v199, 128
        %342 = vxpose.xlu0.b32.cont [10/16] %v202, 128
        %343 = vxpose.xlu0.b32.cont [11/16] %v205, 128
        %344 = vxpose.xlu0.b32.cont [12/16] %v208, 128
        %345 = vxpose.xlu0.b32.cont [13/16] %v211, 128
        %346 = vxpose.xlu0.b32.cont [14/16] %v214, 128
        %347 = vxpose.xlu0.b32.cont [15/16] %v217, 128
        %348 = vxpose.xlu0.b32.end [16/16] %v220, 128
        %v349 = vpop.trf.xlu0
        %v350 = vpop.trf.xlu0
        %v351 = vpop.trf.xlu0
        %v352 = vpop.trf.xlu0
        %v353 = vpop.trf.xlu0
        %v354 = vpop.trf.xlu0
        %v355 = vpop.trf.xlu0
        %v356 = vpop.trf.xlu0
        %v357 = vpop.trf.xlu0
        %v358 = vpop.trf.xlu0
        %v359 = vpop.trf.xlu0
        %v360 = vpop.trf.xlu0
        %v361 = vpop.trf.xlu0
        %v362 = vpop.trf.xlu0
        %v363 = vpop.trf.xlu0
        %v364 = vpop.trf.xlu0
        %365 = vxpose.xlu0.b32.start [1/16] %v221, 128
        %366 = vxpose.xlu0.b32.cont [2/16] %v224, 128
        %367 = vxpose.xlu0.b32.cont [3/16] %v227, 128
        %368 = vxpose.xlu0.b32.cont [4/16] %v230, 128
        %369 = vxpose.xlu0.b32.cont [5/16] %v233, 128
        %370 = vxpose.xlu0.b32.cont [6/16] %v236, 128
        %371 = vxpose.xlu0.b32.cont [7/16] %v239, 128
        %372 = vxpose.xlu0.b32.cont [8/16] %v242, 128
        %373 = vxpose.xlu0.b32.cont [9/16] %v245, 128
        %374 = vxpose.xlu0.b32.cont [10/16] %v248, 128
        %375 = vxpose.xlu0.b32.cont [11/16] %v251, 128
        %376 = vxpose.xlu0.b32.cont [12/16] %v254, 128
        %377 = vxpose.xlu0.b32.cont [13/16] %v257, 128
        %378 = vxpose.xlu0.b32.cont [14/16] %v260, 128
        %379 = vxpose.xlu0.b32.cont [15/16] %v263, 128
        %380 = vxpose.xlu0.b32.end [16/16] %v266, 128
        %v381 = vpop.trf.xlu0
        %v382 = vpop.trf.xlu0
        %v383 = vpop.trf.xlu0
        %v384 = vpop.trf.xlu0
        %v385 = vpop.trf.xlu0
        %v386 = vpop.trf.xlu0
        %v387 = vpop.trf.xlu0
        %v388 = vpop.trf.xlu0
        %v389 = vpop.trf.xlu0
        %v390 = vpop.trf.xlu0
        %v391 = vpop.trf.xlu0
        %v392 = vpop.trf.xlu0
        %v393 = vpop.trf.xlu0
        %v394 = vpop.trf.xlu0
        %v395 = vpop.trf.xlu0
        %v396 = vpop.trf.xlu0
        %397 = vxpose.xlu0.b32.start [1/16] %v222, 128
        %398 = vxpose.xlu0.b32.cont [2/16] %v225, 128
        %399 = vxpose.xlu0.b32.cont [3/16] %v228, 128
        %400 = vxpose.xlu0.b32.cont [4/16] %v231, 128
        %401 = vxpose.xlu0.b32.cont [5/16] %v234, 128
        %402 = vxpose.xlu0.b32.cont [6/16] %v237, 128
        %403 = vxpose.xlu0.b32.cont [7/16] %v240, 128
        %404 = vxpose.xlu0.b32.cont [8/16] %v243, 128
        %405 = vxpose.xlu0.b32.cont [9/16] %v246, 128
        %406 = vxpose.xlu0.b32.cont [10/16] %v249, 128
        %407 = vxpose.xlu0.b32.cont [11/16] %v252, 128
        %408 = vxpose.xlu0.b32.cont [12/16] %v255, 128
        %409 = vxpose.xlu0.b32.cont [13/16] %v258, 128
        %410 = vxpose.xlu0.b32.cont [14/16] %v261, 128
        %411 = vxpose.xlu0.b32.cont [15/16] %v264, 128
        %412 = vxpose.xlu0.b32.end [16/16] %v267, 128
        %v413 = vpop.trf.xlu0
        %v414 = vpop.trf.xlu0
        %v415 = vpop.trf.xlu0
        %v416 = vpop.trf.xlu0
        %v417 = vpop.trf.xlu0
        %v418 = vpop.trf.xlu0
        %v419 = vpop.trf.xlu0
        %v420 = vpop.trf.xlu0
        %v421 = vpop.trf.xlu0
        %v422 = vpop.trf.xlu0
        %v423 = vpop.trf.xlu0
        %v424 = vpop.trf.xlu0
        %v425 = vpop.trf.xlu0
        %v426 = vpop.trf.xlu0
        %v427 = vpop.trf.xlu0
        %v428 = vpop.trf.xlu0
        %429 = vxpose.xlu0.b32.start [1/16] %v223, 128
        %430 = vxpose.xlu0.b32.cont [2/16] %v226, 128
        %431 = vxpose.xlu0.b32.cont [3/16] %v229, 128
        %432 = vxpose.xlu0.b32.cont [4/16] %v232, 128
        %433 = vxpose.xlu0.b32.cont [5/16] %v235, 128
        %434 = vxpose.xlu0.b32.cont [6/16] %v238, 128
        %435 = vxpose.xlu0.b32.cont [7/16] %v241, 128
        %436 = vxpose.xlu0.b32.cont [8/16] %v244, 128
        %437 = vxpose.xlu0.b32.cont [9/16] %v247, 128
        %438 = vxpose.xlu0.b32.cont [10/16] %v250, 128
        %439 = vxpose.xlu0.b32.cont [11/16] %v253, 128
        %440 = vxpose.xlu0.b32.cont [12/16] %v256, 128
        %441 = vxpose.xlu0.b32.cont [13/16] %v259, 128
        %442 = vxpose.xlu0.b32.cont [14/16] %v262, 128
        %443 = vxpose.xlu0.b32.cont [15/16] %v265, 128
        %444 = vxpose.xlu0.b32.end [16/16] %v268, 128
        %v445 = vpop.trf.xlu0
        %v446 = vpop.trf.xlu0
        %v447 = vpop.trf.xlu0
        %v448 = vpop.trf.xlu0
        %v449 = vpop.trf.xlu0
        %v450 = vpop.trf.xlu0
        %v451 = vpop.trf.xlu0
        %v452 = vpop.trf.xlu0
        %v453 = vpop.trf.xlu0
        %v454 = vpop.trf.xlu0
        %v455 = vpop.trf.xlu0
        %v456 = vpop.trf.xlu0
        %v457 = vpop.trf.xlu0
        %v458 = vpop.trf.xlu0
        %v459 = vpop.trf.xlu0
        %v460 = vpop.trf.xlu0
        %461 = vst [vmem:[%s168] sm:$0xff] %v285
        %462 = vst [vmem:[%s168 + $0x8] sm:$0xff] %v381
        %463 = vst [vmem:[%s168 + $0x10] sm:$0xff] %v286
        %464 = vst [vmem:[%s168 + $0x18] sm:$0xff] %v382
        %465 = vst [vmem:[%s168 + $0x20] sm:$0xff] %v287
        %466 = vst [vmem:[%s168 + $0x28] sm:$0xff] %v383
        %467 = vst [vmem:[%s168 + $0x30] sm:$0xff] %v288
        %468 = vst [vmem:[%s168 + $0x38] sm:$0xff] %v384
        %469 = vst [vmem:[%s168 + $0x40] sm:$0xff] %v289
        %470 = vst [vmem:[%s168 + $0x48] sm:$0xff] %v385
        %471 = vst [vmem:[%s168 + $0x50] sm:$0xff] %v290
        %472 = vst [vmem:[%s168 + $0x58] sm:$0xff] %v386
        %473 = vst [vmem:[%s168 + $0x60] sm:$0xff] %v291
        %474 = vst [vmem:[%s168 + $0x68] sm:$0xff] %v387
        %475 = vst [vmem:[%s168 + $0x70] sm:$0xff] %v292
        %476 = vst [vmem:[%s168 + $0x78] sm:$0xff] %v388
        %477 = vst [vmem:[%s168 + $0x80] sm:$0xff] %v293
        %478 = vst [vmem:[%s168 + $0x88] sm:$0xff] %v389
        %479 = vst [vmem:[%s168 + $0x90] sm:$0xff] %v294
        %480 = vst [vmem:[%s168 + $0x98] sm:$0xff] %v390
        %481 = vst [vmem:[%s168 + $0xa0] sm:$0xff] %v295
        %482 = vst [vmem:[%s168 + $0xa8] sm:$0xff] %v391
        %483 = vst [vmem:[%s168 + $0xb0] sm:$0xff] %v296
        %484 = vst [vmem:[%s168 + $0xb8] sm:$0xff] %v392
        %485 = vst [vmem:[%s168 + $0xc0] sm:$0xff] %v297
        %486 = vst [vmem:[%s168 + $0xc8] sm:$0xff] %v393
        %487 = vst [vmem:[%s168 + $0xd0] sm:$0xff] %v298
        %488 = vst [vmem:[%s168 + $0xd8] sm:$0xff] %v394
        %489 = vst [vmem:[%s168 + $0xe0] sm:$0xff] %v299
        %490 = vst [vmem:[%s168 + $0xe8] sm:$0xff] %v395
        %491 = vst [vmem:[%s168 + $0xf0] sm:$0xff] %v300
        %492 = vst [vmem:[%s168 + $0xf8] sm:$0xff] %v396
        %493 = vst [vmem:[%s168 + $0x100] sm:$0xff] %v317
        %494 = vst [vmem:[%s168 + $0x108] sm:$0xff] %v413
        %495 = vst [vmem:[%s168 + $0x110] sm:$0xff] %v318
        %496 = vst [vmem:[%s168 + $0x118] sm:$0xff] %v414
        %497 = vst [vmem:[%s168 + $0x120] sm:$0xff] %v319
        %498 = vst [vmem:[%s168 + $0x128] sm:$0xff] %v415
        %499 = vst [vmem:[%s168 + $0x130] sm:$0xff] %v320
        %500 = vst [vmem:[%s168 + $0x138] sm:$0xff] %v416
        %501 = vst [vmem:[%s168 + $0x140] sm:$0xff] %v321
        %502 = vst [vmem:[%s168 + $0x148] sm:$0xff] %v417
        %503 = vst [vmem:[%s168 + $0x150] sm:$0xff] %v322
        %504 = vst [vmem:[%s168 + $0x158] sm:$0xff] %v418
        %505 = vst [vmem:[%s168 + $0x160] sm:$0xff] %v323
        %506 = vst [vmem:[%s168 + $0x168] sm:$0xff] %v419
        %507 = vst [vmem:[%s168 + $0x170] sm:$0xff] %v324
        %508 = vst [vmem:[%s168 + $0x178] sm:$0xff] %v420
        %509 = vst [vmem:[%s168 + $0x180] sm:$0xff] %v325
        %510 = vst [vmem:[%s168 + $0x188] sm:$0xff] %v421
        %511 = vst [vmem:[%s168 + $0x190] sm:$0xff] %v326
        %512 = vst [vmem:[%s168 + $0x198] sm:$0xff] %v422
        %513 = vst [vmem:[%s168 + $0x1a0] sm:$0xff] %v327
        %514 = vst [vmem:[%s168 + $0x1a8] sm:$0xff] %v423
        %515 = vst [vmem:[%s168 + $0x1b0] sm:$0xff] %v328
        %516 = vst [vmem:[%s168 + $0x1b8] sm:$0xff] %v424
        %517 = vst [vmem:[%s168 + $0x1c0] sm:$0xff] %v329
        %518 = vst [vmem:[%s168 + $0x1c8] sm:$0xff] %v425
        %519 = vst [vmem:[%s168 + $0x1d0] sm:$0xff] %v330
        %520 = vst [vmem:[%s168 + $0x1d8] sm:$0xff] %v426
        %521 = vst [vmem:[%s168 + $0x1e0] sm:$0xff] %v331
        %522 = vst [vmem:[%s168 + $0x1e8] sm:$0xff] %v427
        %523 = vst [vmem:[%s168 + $0x1f0] sm:$0xff] %v332
        %524 = vst [vmem:[%s168 + $0x1f8] sm:$0xff] %v428
        %525 = vst [vmem:[%s168 + $0x200] sm:$0xff] %v349
        %526 = vst [vmem:[%s168 + $0x208] sm:$0xff] %v445
        %527 = vst [vmem:[%s168 + $0x210] sm:$0xff] %v350
        %528 = vst [vmem:[%s168 + $0x218] sm:$0xff] %v446
        %529 = vst [vmem:[%s168 + $0x220] sm:$0xff] %v351
        %530 = vst [vmem:[%s168 + $0x228] sm:$0xff] %v447
        %531 = vst [vmem:[%s168 + $0x230] sm:$0xff] %v352
        %532 = vst [vmem:[%s168 + $0x238] sm:$0xff] %v448
        %533 = vst [vmem:[%s168 + $0x240] sm:$0xff] %v353
        %534 = vst [vmem:[%s168 + $0x248] sm:$0xff] %v449
        %535 = vst [vmem:[%s168 + $0x250] sm:$0xff] %v354
        %536 = vst [vmem:[%s168 + $0x258] sm:$0xff] %v450
        %537 = vst [vmem:[%s168 + $0x260] sm:$0xff] %v355
        %538 = vst [vmem:[%s168 + $0x268] sm:$0xff] %v451
        %539 = vst [vmem:[%s168 + $0x270] sm:$0xff] %v356
        %540 = vst [vmem:[%s168 + $0x278] sm:$0xff] %v452
        %541 = vst [vmem:[%s168 + $0x280] sm:$0xff] %v357
        %542 = vst [vmem:[%s168 + $0x288] sm:$0xff] %v453
        %543 = vst [vmem:[%s168 + $0x290] sm:$0xff] %v358
        %544 = vst [vmem:[%s168 + $0x298] sm:$0xff] %v454
        %545 = vst [vmem:[%s168 + $0x2a0] sm:$0xff] %v359
        %546 = vst [vmem:[%s168 + $0x2a8] sm:$0xff] %v455
        %547 = vst [vmem:[%s168 + $0x2b0] sm:$0xff] %v360
        %548 = vst [vmem:[%s168 + $0x2b8] sm:$0xff] %v456
        %549 = vst [vmem:[%s168 + $0x2c0] sm:$0xff] %v361
        %550 = vst [vmem:[%s168 + $0x2c8] sm:$0xff] %v457
        %551 = vst [vmem:[%s168 + $0x2d0] sm:$0xff] %v362
        %552 = vst [vmem:[%s168 + $0x2d8] sm:$0xff] %v458
        %553 = vst [vmem:[%s168 + $0x2e0] sm:$0xff] %v363
        %554 = vst [vmem:[%s168 + $0x2e8] sm:$0xff] %v459
        %555 = vst [vmem:[%s168 + $0x2f0] sm:$0xff] %v364
        %556 = vst [vmem:[%s168 + $0x2f8] sm:$0xff] %v460
        %s557 = sand.u32 %s79, 1
        %s558 = scalar_lea.sflag [#allocation4], %s557
        %s559 = sand.u32 %s79, 1
        %s560 = smul.addr %s559, 768
        %s561 = scalar_lea.vmem [#allocation5], %s560
        // Predicated region
        $region29: #{tpu_custom_call.1} parent=23 // pred_check
          %p562 = pneg %p89
        $region30: #{tpu_custom_call.1} parent=23 // pred_check_branch
          %564 = sbr.rel (%p562) target = $region32
        $region31: #{tpu_custom_call.1} parent=23 // pred_region
          %s565 = smul.u32 48, %s25
          %s566 = smul.u32 2, %s24
          %568 = vsyncadd %s558, 0
          %s569 = smul.addr %s565, 2
          %s570 = sadd.s32 %s566, %s569
          %s571 = smul.addr %s23, 96
          %s572 = sadd.s32 %s570, %s571
          %s573 = smul.addr %s572, 8
          %s574 = scalar_lea.hbm %s1, %s573
          %s575 = sshll.u32 %s561, 4
          %s576 = int_to_ptr.vmem [resolvable:$true] %s575
          %s577 = sshll.u32 %s574, 4
          %s578 = int_to_ptr.hbm [resolvable:$true] %s577
          %583 = dma.vmem_to_hbm [thread:$0]  %s576, 12288, %s578, %s558, 256, 256, 16
        $region32: #{tpu_custom_call.1} parent=23 // pred_fallthru
          _
      $region24: #{tpu_custom_call.1} parent=5 // pred_fallthru
        _
      %p584 = scmp.le.s32.totalorder 2, %s13
      // Predicated region
      $region33: #{tpu_custom_call.1} parent=5 // pred_check
        %p585 = pneg %p584
      $region34: #{tpu_custom_call.1} parent=5 // pred_check_branch
        %587 = sbr.rel (%p585) target = $region36
      $region35: #{tpu_custom_call.1} parent=5 // pred_region
        %s588 = ssub.s32 %s13, 2
        // Predicated region
        $region37: #{tpu_custom_call.1} parent=35 // pred_check
          %p589 = pneg %p95
        $region38: #{tpu_custom_call.1} parent=35 // pred_check_branch
          %591 = sbr.rel (%p589) target = $region40
        $region39: #{tpu_custom_call.1} parent=35 // pred_region
          %s592 = sand.u32 %s80, 1
          %s593 = scalar_lea.sflag [#allocation4], %s592
          %s594 = sand.u32 %s80, 1
          %s595 = smul.addr %s594, 768
          %s596 = scalar_lea.vmem [#allocation5], %s595
          %598 = dma.done %s593, 12288
        $region40: #{tpu_custom_call.1} parent=35 // pred_fallthru
          _
      $region36: #{tpu_custom_call.1} parent=5 // pred_fallthru
        _
    $region6: #{tpu_custom_call.1} parent=1 // loop_footer
      %s17 = sadd.s32 1, %s13
    $region7: #{tpu_custom_call.1} parent=1 // loop_footer_branch
      %12 = sbr.rel target = $region3
    $region8: #{tpu_custom_call.1} parent=1 // loop_exit
      _
    %599 = vsyncpa [#allocation3], 1
    %s600 = scalar_lea.sflag [#allocation3], 1
    %601 = vsyncpa %s600, 1
    %602 = vsyncpa [#allocation4], 1
    %s603 = scalar_lea.sflag [#allocation4], 1
    %604 = vsyncpa %s603, 1

</llo_original>
